<compile_context>
chip_gen: v6e
topology: v6e:2x2x1
jax: 0.10.0
libtpu: 0.0.40
codegen_flags: <defaults>
</compile_context>

<pallas_src>
import functools
import math

import jax
import jax.numpy as jnp
from jax import lax
from jax.experimental import pallas as pl
from jax.experimental.pallas import tpu as pltpu

_LANES = 128
_EPS = 1e-7
_COS_PI_4 = math.cos(math.pi / 4.0)


def _round_up(x, m):
    return (x + m - 1) // m * m


def _make_kernel(*, beta, b_actual, c_actual, c_pad, c_tile, num_c, cached):
    ragged = (c_pad != c_actual)
    n_slab = c_tile // _LANES

    def kernel(s_old_ref, labels_ref, logits_ref,          # inputs
               loss_ref, s_new_ref,                         # outputs (SMEM)
               bnum, tgt, l1, l2, s_carry, *maybe_cache):   # scratch
        cache = maybe_cache[0] if cached else None
        p = pl.program_id(0)            # 0: statistics sweep, 1: scaled-CE sweep
        c = pl.program_id(1)            # grid step along the class-tile axis
        Bp = bnum.shape[0]

        def lane_acc(acc_ref, term):
            # Fold (Bp, c_tile) into (Bp, 128) lane-partial sums on the VPU; the
            # single cross-lane reduce happens once at the sweep boundary.
            slabs = [term[:, k * _LANES:(k + 1) * _LANES] for k in range(n_slab)]
            while len(slabs) > 1:
                nxt = [slabs[i] + slabs[i + 1] for i in range(0, len(slabs) - 1, 2)]
                if len(slabs) % 2:
                    nxt.append(slabs[-1])
                slabs = nxt
            acc_ref[...] += slabs[0]

        # ------------------------------------------------------------ init
        @pl.when(jnp.logical_and(p == 0, c == 0))
        def _init():
            z = jnp.zeros((Bp, _LANES), jnp.float32)
            bnum[...] = z
            tgt[...] = z
            l1[...] = z
            l2[...] = z

        # --------------------------------------------- sweep 0: statistics
        def sweep0_tile(interior):
            x = logits_ref[...]                                   # (Bp, c_tile) f32
            if cached:
                cache[c] = x                                      # stash for sweep 1
            s_old = s_old_ref[0, 0]
            labels = labels_ref[...]                              # (Bp, 1) int32
            col = lax.broadcasted_iota(jnp.int32, (Bp, c_tile), 1) + c * c_tile
            onehot = (col == labels).astype(jnp.float32)
            # Fixed-shift LSE: exp(x - 1) never overflows for cosines and
            # lse(x) == 1 + log(sum exp(x - 1)).  No online max.
            ex = jnp.exp(x - 1.0)
            # B_avg terms (no shift, faithful to the PyTorch reference).
            es = jnp.exp(s_old * x)
            if not interior:                                      # ragged class tile
                colf = (col < c_actual).astype(jnp.float32)
                ex = ex * colf
                es = es * colf
            lane_acc(l1, ex)
            lane_acc(bnum, es * (1.0 - onehot))
            lane_acc(tgt, x * onehot)

        if ragged:
            @pl.when(jnp.logical_and(p == 0, c < num_c - 1))
            def _s0_full():
                sweep0_tile(interior=True)

            @pl.when(jnp.logical_and(p == 0, c == num_c - 1))
            def _s0_ragged():
                sweep0_tile(interior=False)
        else:
            @pl.when(p == 0)
            def _s0():
                sweep0_tile(interior=True)

        # -------------------------------- end of sweep 0: adaptive scale s_new
        @pl.when(jnp.logical_and(p == 0, c == num_c - 1))
        def _scale():
            row_idx = lax.broadcasted_iota(jnp.int32, (Bp, 1), 0)
            row_ok = row_idx < b_actual
            bnum_col = jnp.sum(bnum[...], axis=1, keepdims=True)
            b_avg = jnp.sum(jnp.where(row_ok, bnum_col, 0.0)) / b_actual

            # Target cosine per row: the one-hot selected exactly one element, so
            # clipping after the sum equals clipping before it.
            tgt_col = jnp.sum(tgt[...], axis=1, keepdims=True)
            cp = jnp.clip(tgt_col, -1.0 + _EPS, 1.0 - _EPS)
            cp = jnp.where(row_ok, cp, jnp.float32(-2.0))   # padded rows -> worst rank

            # torch.median(theta[target]) is the lower median; acos is strictly
            # decreasing, so rank on the clamped cosines (descending).  Fully
            # vectorized all-pairs compare; the "transpose" of cp into lanes is
            # a masked sublane reduction (no serial O(B) loop, no MXU needed).
            ii = lax.broadcasted_iota(jnp.int32, (Bp, Bp), 0)
            jj = lax.broadcasted_iota(jnp.int32, (Bp, Bp), 1)
            ci = jnp.broadcast_to(cp, (Bp, Bp))                          # cp[i]
            cj_row = jnp.sum(jnp.where(ii == jj, ci, 0.0),
                             axis=0, keepdims=True)                      # (1, Bp)
            cj = jnp.broadcast_to(cj_row, (Bp, Bp))                      # cp[j]
            before = jnp.logical_or(cj > ci,
                                    jnp.logical_and(cj == ci, jj < ii))
            counted = jnp.logical_and(before, jj < b_actual)
            rank = jnp.sum(counted.astype(jnp.float32), axis=1, keepdims=True)
            k_med = (b_actual - 1) // 2
            cos_med = jnp.sum(jnp.where(rank == k_med, cp, 0.0))

            # cos(min(pi/4, theta_med)) == max(cos(pi/4), cos(theta_med)).
            cos_term = jnp.maximum(jnp.float32(_COS_PI_4), cos_med)
            s_carry[0, 0] = jnp.log(b_avg) / cos_term

        # ------------------------------------------ sweep 1: scaled log-sum-exp
        cb1 = c if cached else (num_c - 1 - c)      # class block handled this step

        def sweep1_tile(interior):
            s_new = s_carry[0, 0]
            x = cache[cb1] if cached else logits_ref[...]
            # lse(s*x) == s + log(sum exp(s*(x-1))); exponent <= 0 for cosines.
            t = jnp.exp(s_new * (x - 1.0))
            if not interior:
                col = (lax.broadcasted_iota(jnp.int32, (Bp, c_tile), 1)
                       + cb1 * c_tile)
                t = jnp.where(col < c_actual, t, 0.0)
            lane_acc(l2, t)

        if ragged:
            @pl.when(jnp.logical_and(p == 1, cb1 < num_c - 1))
            def _s1_full():
                sweep1_tile(interior=True)

            @pl.when(jnp.logical_and(p == 1, cb1 == num_c - 1))
            def _s1_ragged():
                sweep1_tile(interior=False)
        else:
            @pl.when(p == 1)
            def _s1():
                sweep1_tile(interior=True)

        # ------------------------------------------------ last step: the loss
        @pl.when(jnp.logical_and(p == 1, c == num_c - 1))
        def _finish():
            s_new = s_carry[0, 0]
            row_idx = lax.broadcasted_iota(jnp.int32, (Bp, 1), 0)
            row_ok = row_idx < b_actual
            tgt_col = jnp.sum(tgt[...], axis=1, keepdims=True)
            lse1 = 1.0 + jnp.log(jnp.sum(l1[...], axis=1, keepdims=True))
            lse2 = s_new + jnp.log(jnp.sum(l2[...], axis=1, keepdims=True))
            per_row = beta * (lse2 - s_new * tgt_col) + (lse1 - tgt_col)
            loss = (jnp.sum(jnp.where(row_ok, per_row, 0.0))
                    / b_actual / (1.0 + beta))
            loss_ref[0, 0] = loss
            s_new_ref[0, 0] = s_new

    return kernel


def adacos_loss(logits, labels, s_old, *, num_classes, beta=1.0,
                c_tile=None, resident_bytes=None):
    """AdaCosLoss.forward.  Returns (loss, s_new); s_new is the updated scale
    (the `self.s` state the PyTorch module mutates in place)."""
    logits = jnp.asarray(logits, jnp.float32)
    labels = jnp.asarray(labels, jnp.int32)
    B, C = logits.shape
    assert C == num_classes

    # --- hardware-aware budgets --------------------------------------------
    try:
        vmem_cap = int(pltpu.get_tpu_info().vmem_capacity_bytes)
    except Exception:
        vmem_cap = 64 << 20                      # conservative (v7x per-core)
    vmem_limit_cap = int(vmem_cap * 0.75)        # leave Mosaic/pipeline headroom
    if resident_bytes is None:
        resident_bytes = int(vmem_cap * 0.5)     # budget for the logits cache

    # --- lane/sublane friendly padding & tile sizing ------------------------
    B_pad = _round_up(B, 8)
    if c_tile is None:
        # ~2 MiB per streamed logits buffer, capped so double-buffering stays
        # well inside VMEM on every generation.
        c_tile = max(_LANES, (2 << 20) // (4 * B_pad) // _LANES * _LANES)
        max_tile = max(_LANES, (8 << 20) // (4 * B_pad) // _LANES * _LANES)
        c_tile = min(c_tile, max_tile)
    c_tile = min(_round_up(int(c_tile), _LANES), _round_up(C, _LANES))
    C_pad = _round_up(C, c_tile)
    num_c = C_pad // c_tile

    # Keep the whole padded logits resident in VMEM across both sweeps when it
    # fits -> logits are read from HBM exactly once.  With a single class tile
    # the pipeline buffer itself stays resident, so no extra cache is needed.
    cached = (num_c > 1) and (4 * B_pad * C_pad <= resident_bytes)

    logits_p = jnp.pad(logits, ((0, B_pad - B), (0, C_pad - C)))
    labels_p = jnp.pad(labels, (0, B_pad - B)).reshape(B_pad, 1)
    s_arr = jnp.asarray(s_old, jnp.float32).reshape(1, 1)

    kernel = _make_kernel(beta=float(beta), b_actual=B, c_actual=C,
                          c_pad=C_pad, c_tile=c_tile, num_c=num_c,
                          cached=cached)

    if cached:
        # Sweep 1 reads the VMEM cache; freeze its block index on the last
        # sweep-0 block so no HBM DMA is issued at all during sweep 1.
        logits_map = lambda p, c: (0, c + p * (num_c - 1 - c))
    else:
        # Reverse sweep 1's traversal so its first tile is the one already
        # resident from the end of sweep 0 (saves one refetch).
        logits_map = lambda p, c: (0, c + p * (num_c - 1 - 2 * c))

    scratch = [pltpu.VMEM((B_pad, _LANES), jnp.float32) for _ in range(4)]
    scratch.append(pltpu.SMEM((1, 1), jnp.float32))          # s_new carry
    if cached:
        scratch.append(pltpu.VMEM((num_c, B_pad, c_tile), jnp.float32))

    vmem_bytes = (2 * 4 * B_pad * c_tile            # double-buffered logits tile
                  + 2 * 4 * B_pad * _LANES          # labels block (lane padded)
                  + 4 * 4 * B_pad * _LANES          # lane-partial accumulators
                  + 2 * 4 * B_pad * B_pad           # median all-pairs temporaries
                  + (4 * B_pad * C_pad if cached else 0))
    vmem_limit = int(min(max(vmem_bytes + (2 << 20), 4 << 20), vmem_limit_cap))

    hbm_passes = 1 if (cached or num_c == 1) else 2
    loss, s_new = pl.pallas_call(
        kernel,
        out_shape=(jax.ShapeDtypeStruct((1, 1), jnp.float32),
                   jax.ShapeDtypeStruct((1, 1), jnp.float32)),
        grid_spec=pltpu.PrefetchScalarGridSpec(
            num_scalar_prefetch=0,
            grid=(2, num_c),
            in_specs=[
                pl.BlockSpec(memory_space=pltpu.MemorySpace.SMEM),   # s_old (1,1)
                pl.BlockSpec((B_pad, 1), lambda p, c: (0, 0)),       # labels
                pl.BlockSpec((B_pad, c_tile), logits_map),           # logits tile
            ],
            out_specs=(
                pl.BlockSpec(memory_space=pltpu.MemorySpace.SMEM),   # loss
                pl.BlockSpec(memory_space=pltpu.MemorySpace.SMEM),   # s_new
            ),
            scratch_shapes=scratch,
        ),
        compiler_params=pltpu.CompilerParams(
            dimension_semantics=("arbitrary", "arbitrary"),
            vmem_limit_bytes=vmem_limit),
        cost_estimate=pl.CostEstimate(
            flops=10 * B_pad * C_pad,
            transcendentals=3 * B_pad * C_pad,
            bytes_accessed=hbm_passes * 4 * B_pad * C_pad),
    )(s_arr, labels_p, logits_p)
    return loss[0, 0], s_new[0, 0]


def _adacos_ref(logits, labels, s_old, beta, num_classes):
    """Pure-JAX reference mirroring the PyTorch forward exactly."""
    B = logits.shape[0]
    eps = 1e-7
    theta = jnp.arccos(jnp.clip(logits, -1.0 + eps, 1.0 - eps))
    oh = jax.nn.one_hot(labels, num_classes, dtype=logits.dtype)
    b_avg = jnp.sum(jnp.where(oh < 1, jnp.exp(s_old * logits), 0.0)) / B
    theta_pos = jnp.sort(theta[jnp.arange(B), labels])
    theta_med = theta_pos[(B - 1) // 2]                    # torch lower-median
    s_new = jnp.log(b_avg) / jnp.cos(jnp.minimum(jnp.pi / 4.0, theta_med))

    def ce(v):
        logp = jax.nn.log_softmax(v, axis=1)
        return -jnp.mean(logp[jnp.arange(B), labels])

    loss1 = ce(s_new * logits)
    loss2 = ce(logits)
    return (beta * loss1 + loss2) / (1.0 + beta), s_new


def _check(name, got, want, atol=1e-3, rtol=1e-4):
    got = float(got)
    want = float(want)
    assert abs(got - want) <= atol + rtol * abs(want), (name, got, want)


if __name__ == "__main__":
    key = jax.random.PRNGKey(0)
    k1, k2, k3, k4, k5, k6 = jax.random.split(key, 6)

    # ---- test 1: single class tile, B == B_pad ------------------------------
    B, C = 8, 16
    logits = jax.random.uniform(k1, (B, C), jnp.float32, minval=-0.999, maxval=0.999)
    labels = jax.random.randint(k2, (B,), 0, C)
    s_init = math.sqrt(2.0) * math.log(C - 1)              # AdaCosLoss.__init__
    loss, s_new = adacos_loss(logits, labels, s_init, num_classes=C, beta=1.0)
    jax.block_until_ready((loss, s_new))
    ref_loss, ref_s = _adacos_ref(logits, labels, s_init, 1.0, C)
    _check("loss1", loss, ref_loss)
    _check("s1", s_new, ref_s)

    # ---- test 2: padded rows (10->16), 3 class tiles with a ragged tail,
    #              logits cached in VMEM across both sweeps (single HBM read) --
    B2, C2 = 10, 300
    logits2 = jax.random.uniform(k3, (B2, C2), jnp.float32, minval=-0.999, maxval=0.999)
    labels2 = jax.random.randint(k4, (B2,), 0, C2)
    s_init2 = math.sqrt(2.0) * math.log(C2 - 1)
    loss2, s2 = adacos_loss(logits2, labels2, s_init2, num_classes=C2,
                            beta=2.0, c_tile=128)
    jax.block_until_ready((loss2, s2))
    ref_loss2, ref_s2 = _adacos_ref(logits2, labels2, s_init2, 2.0, C2)
    _check("loss2", loss2, ref_loss2)
    _check("s2", s2, ref_s2)

    # ---- test 3: streaming path (cache disabled), reversed sweep-1 traversal -
    B3, C3 = 12, 300
    logits3 = jax.random.uniform(k5, (B3, C3), jnp.float32, minval=-0.999, maxval=0.999)
    labels3 = jax.random.randint(k6, (B3,), 0, C3)
    s_init3 = math.sqrt(2.0) * math.log(C3 - 1)
    loss3, s3 = adacos_loss(logits3, labels3, s_init3, num_classes=C3,
                            beta=0.5, c_tile=128, resident_bytes=0)
    jax.block_until_ready((loss3, s3))
    ref_loss3, ref_s3 = _adacos_ref(logits3, labels3, s_init3, 0.5, C3)
    _check("loss3", loss3, ref_loss3)
    _check("s3", s3, ref_s3)

    print("KERNEL_OK")
</pallas_src>

<mosaic_0001>
module attributes {stable_mosaic.version = 11 : i64} {
  func.func @kernel(%arg0: i32, %arg1: i32, %arg2: memref<1x1xf32, #tpu.memory_space<smem>>, %arg3: memref<8x1xi32, #tpu.memory_space<vmem>>, %arg4: memref<8x128xf32, #tpu.memory_space<vmem>>, %arg5: memref<1x1xf32, #tpu.memory_space<smem>>, %arg6: memref<1x1xf32, #tpu.memory_space<smem>>, %arg7: memref<8x128xf32, #tpu.memory_space<vmem>>, %arg8: memref<8x128xf32, #tpu.memory_space<vmem>>, %arg9: memref<8x128xf32, #tpu.memory_space<vmem>>, %arg10: memref<8x128xf32, #tpu.memory_space<vmem>>, %arg11: memref<1x1xf32, #tpu.memory_space<smem>>) attributes {dimension_semantics = [#tpu.dimension_semantics<arbitrary>, #tpu.dimension_semantics<arbitrary>], iteration_bounds = array<i64: 2, 1>, scalar_prefetch = 0 : i64, scratch_operands = 5 : i64, tpu.core_type = #tpu.core_type<tc>, window_params = [{transform_indices = @transform_0, window_bounds = array<i64: 1, 1>}, {pipeline_mode = #tpu.pipeline_mode<synchronous>, transform_indices = @transform_1, window_bounds = array<i64: 8, 1>}, {transform_indices = @transform_2, window_bounds = array<i64: 8, 128>}, {transform_indices = @transform_3, window_bounds = array<i64: 1, 1>}, {transform_indices = @transform_4, window_bounds = array<i64: 1, 1>}]} {
    %c0_i32 = arith.constant 0 : i32
    %0 = arith.cmpi eq, %arg0, %c0_i32 : i32
    %c0_i32_0 = arith.constant 0 : i32
    %1 = arith.cmpi eq, %arg1, %c0_i32_0 : i32
    %2 = arith.andi %0, %1 : i1
    %3 = arith.extui %2 : i1 to i32
    %c0_i32_1 = arith.constant 0 : i32
    %4 = arith.cmpi ne, %3, %c0_i32_1 : i32
    scf.if %4 {
      %cst = arith.constant 0.000000e+00 : f32
      %36 = vector.broadcast %cst : f32 to vector<8x128xf32>
      %c0 = arith.constant 0 : index
      %c0_20 = arith.constant 0 : index
      %37 = vector.load %arg7[%c0, %c0_20] : memref<8x128xf32, #tpu.memory_space<vmem>>, vector<8x128xf32>
      tpu.vector_store %arg7[%c0, %c0_20], %36 {strides = array<i32>} : memref<8x128xf32, #tpu.memory_space<vmem>>, vector<8x128xf32>,
      %c0_21 = arith.constant 0 : index
      %c0_22 = arith.constant 0 : index
      %38 = vector.load %arg8[%c0_21, %c0_22] : memref<8x128xf32, #tpu.memory_space<vmem>>, vector<8x128xf32>
      tpu.vector_store %arg8[%c0_21, %c0_22], %36 {strides = array<i32>} : memref<8x128xf32, #tpu.memory_space<vmem>>, vector<8x128xf32>,
      %c0_23 = arith.constant 0 : index
      %c0_24 = arith.constant 0 : index
      %39 = vector.load %arg9[%c0_23, %c0_24] : memref<8x128xf32, #tpu.memory_space<vmem>>, vector<8x128xf32>
      tpu.vector_store %arg9[%c0_23, %c0_24], %36 {strides = array<i32>} : memref<8x128xf32, #tpu.memory_space<vmem>>, vector<8x128xf32>,
      %c0_25 = arith.constant 0 : index
      %c0_26 = arith.constant 0 : index
      %40 = vector.load %arg10[%c0_25, %c0_26] : memref<8x128xf32, #tpu.memory_space<vmem>>, vector<8x128xf32>
      tpu.vector_store %arg10[%c0_25, %c0_26], %36 {strides = array<i32>} : memref<8x128xf32, #tpu.memory_space<vmem>>, vector<8x128xf32>,
    } else {
    }
    %c0_i32_2 = arith.constant 0 : i32
    %5 = arith.cmpi eq, %arg0, %c0_i32_2 : i32
    %c0_i32_3 = arith.constant 0 : i32
    %6 = arith.cmpi slt, %arg1, %c0_i32_3 : i32
    %7 = arith.andi %5, %6 : i1
    %8 = arith.extui %7 : i1 to i32
    %c0_i32_4 = arith.constant 0 : i32
    %9 = arith.cmpi ne, %8, %c0_i32_4 : i32
    scf.if %9 {
      %c0 = arith.constant 0 : index
      %c0_20 = arith.constant 0 : index
      %36 = vector.load %arg4[%c0, %c0_20] : memref<8x128xf32, #tpu.memory_space<vmem>>, vector<8x128xf32>
      %c0_21 = arith.constant 0 : index
      %c0_22 = arith.constant 0 : index
      %37 = memref.load %arg2[%c0_21, %c0_22] : memref<1x1xf32, #tpu.memory_space<smem>>
      %c0_23 = arith.constant 0 : index
      %c0_24 = arith.constant 0 : index
      %38 = vector.load %arg3[%c0_23, %c0_24] : memref<8x1xi32, #tpu.memory_space<vmem>>, vector<8x1xi32>
      %39 = tpu.iota {dimensions = array<i32: 1>} : vector<8x128xi32>
      %c128_i32 = arith.constant 128 : i32
      %40 = arith.muli %arg1, %c128_i32 : i32
      %41 = vector.broadcast %40 : i32 to vector<8x128xi32>
      %42 = arith.addi %39, %41 : vector<8x128xi32>
      %43 = vector.broadcast %38 : vector<8x1xi32> to vector<8x128xi32>
      %44 = arith.cmpi eq, %42, %43 : vector<8x128xi32>
      %45 = arith.extui %44 : vector<8x128xi1> to vector<8x128xi32>
      %46 = arith.sitofp %45 : vector<8x128xi32> to vector<8x128xf32>
      %cst = arith.constant 1.000000e+00 : f32
      %47 = vector.broadcast %cst : f32 to vector<8x128xf32>
      %48 = arith.subf %36, %47 : vector<8x128xf32>
      %49 = math.exp %48 : vector<8x128xf32>
      %50 = vector.broadcast %37 : f32 to vector<8x128xf32>
      %51 = arith.mulf %50, %36 : vector<8x128xf32>
      %52 = math.exp %51 : vector<8x128xf32>
      %c0_25 = arith.constant 0 : index
      %c0_26 = arith.constant 0 : index
      %53 = vector.load %arg9[%c0_25, %c0_26] : memref<8x128xf32, #tpu.memory_space<vmem>>, vector<8x128xf32>
      %54 = arith.addf %53, %49 : vector<8x128xf32>
      %c0_27 = arith.constant 0 : index
      %c0_28 = arith.constant 0 : index
      %55 = vector.load %arg9[%c0_27, %c0_28] : memref<8x128xf32, #tpu.memory_space<vmem>>, vector<8x128xf32>
      tpu.vector_store %arg9[%c0_27, %c0_28], %54 {strides = array<i32>} : memref<8x128xf32, #tpu.memory_space<vmem>>, vector<8x128xf32>,
      %cst_29 = arith.constant 1.000000e+00 : f32
      %56 = vector.broadcast %cst_29 : f32 to vector<8x128xf32>
      %57 = arith.subf %56, %46 : vector<8x128xf32>
      %58 = arith.mulf %52, %57 : vector<8x128xf32>
      %c0_30 = arith.constant 0 : index
      %c0_31 = arith.constant 0 : index
      %59 = vector.load %arg7[%c0_30, %c0_31] : memref<8x128xf32, #tpu.memory_space<vmem>>, vector<8x128xf32>
      %60 = arith.addf %59, %58 : vector<8x128xf32>
      %c0_32 = arith.constant 0 : index
      %c0_33 = arith.constant 0 : index
      %61 = vector.load %arg7[%c0_32, %c0_33] : memref<8x128xf32, #tpu.memory_space<vmem>>, vector<8x128xf32>
      tpu.vector_store %arg7[%c0_32, %c0_33], %60 {strides = array<i32>} : memref<8x128xf32, #tpu.memory_space<vmem>>, vector<8x128xf32>,
      %62 = arith.mulf %36, %46 : vector<8x128xf32>
      %c0_34 = arith.constant 0 : index
      %c0_35 = arith.constant 0 : index
      %63 = vector.load %arg8[%c0_34, %c0_35] : memref<8x128xf32, #tpu.memory_space<vmem>>, vector<8x128xf32>
      %64 = arith.addf %63, %62 : vector<8x128xf32>
      %c0_36 = arith.constant 0 : index
      %c0_37 = arith.constant 0 : index
      %65 = vector.load %arg8[%c0_36, %c0_37] : memref<8x128xf32, #tpu.memory_space<vmem>>, vector<8x128xf32>
      tpu.vector_store %arg8[%c0_36, %c0_37], %64 {strides = array<i32>} : memref<8x128xf32, #tpu.memory_space<vmem>>, vector<8x128xf32>,
    } else {
    }
    %c0_i32_5 = arith.constant 0 : i32
    %10 = arith.cmpi eq, %arg0, %c0_i32_5 : i32
    %c0_i32_6 = arith.constant 0 : i32
    %11 = arith.cmpi eq, %arg1, %c0_i32_6 : i32
    %12 = arith.andi %10, %11 : i1
    %13 = arith.extui %12 : i1 to i32
    %c0_i32_7 = arith.constant 0 : i32
    %14 = arith.cmpi ne, %13, %c0_i32_7 : i32
    scf.if %14 {
      %c0 = arith.constant 0 : index
      %c0_20 = arith.constant 0 : index
      %36 = vector.load %arg4[%c0, %c0_20] : memref<8x128xf32, #tpu.memory_space<vmem>>, vector<8x128xf32>
      %c0_21 = arith.constant 0 : index
      %c0_22 = arith.constant 0 : index
      %37 = memref.load %arg2[%c0_21, %c0_22] : memref<1x1xf32, #tpu.memory_space<smem>>
      %c0_23 = arith.constant 0 : index
      %c0_24 = arith.constant 0 : index
      %38 = vector.load %arg3[%c0_23, %c0_24] : memref<8x1xi32, #tpu.memory_space<vmem>>, vector<8x1xi32>
      %39 = tpu.iota {dimensions = array<i32: 1>} : vector<8x128xi32>
      %c128_i32 = arith.constant 128 : i32
      %40 = arith.muli %arg1, %c128_i32 : i32
      %41 = vector.broadcast %40 : i32 to vector<8x128xi32>
      %42 = arith.addi %39, %41 : vector<8x128xi32>
      %43 = vector.broadcast %38 : vector<8x1xi32> to vector<8x128xi32>
      %44 = arith.cmpi eq, %42, %43 : vector<8x128xi32>
      %45 = arith.extui %44 : vector<8x128xi1> to vector<8x128xi32>
      %46 = arith.sitofp %45 : vector<8x128xi32> to vector<8x128xf32>
      %cst = arith.constant 1.000000e+00 : f32
      %47 = vector.broadcast %cst : f32 to vector<8x128xf32>
      %48 = arith.subf %36, %47 : vector<8x128xf32>
      %49 = math.exp %48 : vector<8x128xf32>
      %50 = vector.broadcast %37 : f32 to vector<8x128xf32>
      %51 = arith.mulf %50, %36 : vector<8x128xf32>
      %52 = math.exp %51 : vector<8x128xf32>
      %c16_i32 = arith.constant 16 : i32
      %53 = vector.broadcast %c16_i32 : i32 to vector<8x128xi32>
      %54 = arith.cmpi slt, %42, %53 : vector<8x128xi32>
      %55 = arith.extui %54 : vector<8x128xi1> to vector<8x128xi32>
      %56 = arith.sitofp %55 : vector<8x128xi32> to vector<8x128xf32>
      %57 = arith.mulf %49, %56 : vector<8x128xf32>
      %58 = arith.mulf %52, %56 : vector<8x128xf32>
      %c0_25 = arith.constant 0 : index
      %c0_26 = arith.constant 0 : index
      %59 = vector.load %arg9[%c0_25, %c0_26] : memref<8x128xf32, #tpu.memory_space<vmem>>, vector<8x128xf32>
      %60 = arith.addf %59, %57 : vector<8x128xf32>
      %c0_27 = arith.constant 0 : index
      %c0_28 = arith.constant 0 : index
      %61 = vector.load %arg9[%c0_27, %c0_28] : memref<8x128xf32, #tpu.memory_space<vmem>>, vector<8x128xf32>
      tpu.vector_store %arg9[%c0_27, %c0_28], %60 {strides = array<i32>} : memref<8x128xf32, #tpu.memory_space<vmem>>, vector<8x128xf32>,
      %cst_29 = arith.constant 1.000000e+00 : f32
      %62 = vector.broadcast %cst_29 : f32 to vector<8x128xf32>
      %63 = arith.subf %62, %46 : vector<8x128xf32>
      %64 = arith.mulf %58, %63 : vector<8x128xf32>
      %c0_30 = arith.constant 0 : index
      %c0_31 = arith.constant 0 : index
      %65 = vector.load %arg7[%c0_30, %c0_31] : memref<8x128xf32, #tpu.memory_space<vmem>>, vector<8x128xf32>
      %66 = arith.addf %65, %64 : vector<8x128xf32>
      %c0_32 = arith.constant 0 : index
      %c0_33 = arith.constant 0 : index
      %67 = vector.load %arg7[%c0_32, %c0_33] : memref<8x128xf32, #tpu.memory_space<vmem>>, vector<8x128xf32>
      tpu.vector_store %arg7[%c0_32, %c0_33], %66 {strides = array<i32>} : memref<8x128xf32, #tpu.memory_space<vmem>>, vector<8x128xf32>,
      %68 = arith.mulf %36, %46 : vector<8x128xf32>
      %c0_34 = arith.constant 0 : index
      %c0_35 = arith.constant 0 : index
      %69 = vector.load %arg8[%c0_34, %c0_35] : memref<8x128xf32, #tpu.memory_space<vmem>>, vector<8x128xf32>
      %70 = arith.addf %69, %68 : vector<8x128xf32>
      %c0_36 = arith.constant 0 : index
      %c0_37 = arith.constant 0 : index
      %71 = vector.load %arg8[%c0_36, %c0_37] : memref<8x128xf32, #tpu.memory_space<vmem>>, vector<8x128xf32>
      tpu.vector_store %arg8[%c0_36, %c0_37], %70 {strides = array<i32>} : memref<8x128xf32, #tpu.memory_space<vmem>>, vector<8x128xf32>,
    } else {
    }
    %c0_i32_8 = arith.constant 0 : i32
    %15 = arith.cmpi eq, %arg0, %c0_i32_8 : i32
    %c0_i32_9 = arith.constant 0 : i32
    %16 = arith.cmpi eq, %arg1, %c0_i32_9 : i32
    %17 = arith.andi %15, %16 : i1
    %18 = arith.extui %17 : i1 to i32
    %c0_i32_10 = arith.constant 0 : i32
    %19 = arith.cmpi ne, %18, %c0_i32_10 : i32
    scf.if %19 {
      %36 = tpu.iota {dimensions = array<i32: 0>} : vector<8x1xi32>
      %c8_i32 = arith.constant 8 : i32
      %37 = vector.broadcast %c8_i32 : i32 to vector<8x1xi32>
      %38 = arith.cmpi slt, %36, %37 : vector<8x1xi32>
      %c0 = arith.constant 0 : index
      %c0_20 = arith.constant 0 : index
      %39 = vector.load %arg7[%c0, %c0_20] : memref<8x128xf32, #tpu.memory_space<vmem>>, vector<8x128xf32>
      %cst = arith.constant dense<0.000000e+00> : vector<8xf32>
      %40 = vector.multi_reduction <add>, %39, %cst [1] : vector<8x128xf32> to vector<8xf32>
      %41 = vector.shape_cast %40 : vector<8xf32> to vector<8x1xf32>
      %cst_21 = arith.constant 0.000000e+00 : f32
      %42 = vector.broadcast %cst_21 : f32 to vector<8x1xf32>
      %43 = arith.select %38, %41, %42 : vector<8x1xi1>, vector<8x1xf32>
      %44 = vector.shape_cast %43 : vector<8x1xf32> to vector<1x8x1xf32>
      %cst_22 = arith.constant dense<0.000000e+00> : vector<1xf32>
      %45 = vector.multi_reduction <add>, %44, %cst_22 [1, 2] : vector<1x8x1xf32> to vector<1xf32>
      %46 = vector.shape_cast %45 : vector<1xf32> to vector<1x1x1xf32>
      %47 = vector.extract %46[0, 0, 0] : f32 from vector<1x1x1xf32>
      %cst_23 = arith.constant 8.000000e+00 : f32
      %48 = arith.divf %47, %cst_23 : f32
      %c0_24 = arith.constant 0 : index
      %c0_25 = arith.constant 0 : index
      %49 = vector.load %arg8[%c0_24, %c0_25] : memref<8x128xf32, #tpu.memory_space<vmem>>, vector<8x128xf32>
      %cst_26 = arith.constant dense<0.000000e+00> : vector<8xf32>
      %50 = vector.multi_reduction <add>, %49, %cst_26 [1] : vector<8x128xf32> to vector<8xf32>
      %51 = vector.shape_cast %50 : vector<8xf32> to vector<8x1xf32>
      %cst_27 = arith.constant -0.99999988 : f32
      %cst_28 = arith.constant 0.99999988 : f32
      %52 = vector.broadcast %cst_27 : f32 to vector<8x1xf32>
      %53 = arith.maximumf %52, %51 : vector<8x1xf32>
      %54 = vector.broadcast %cst_28 : f32 to vector<8x1xf32>
      %55 = arith.minimumf %54, %53 : vector<8x1xf32>
      %cst_29 = arith.constant -2.000000e+00 : f32
      %56 = vector.broadcast %cst_29 : f32 to vector<8x1xf32>
      %57 = arith.select %38, %55, %56 : vector<8x1xi1>, vector<8x1xf32>
      %58 = tpu.iota {dimensions = array<i32: 0>} : vector<8x8xi32>
      %59 = tpu.iota {dimensions = array<i32: 1>} : vector<8x8xi32>
      %60 = vector.shape_cast %57 : vector<8x1xf32> to vector<8x1xf32>
      %61 = vector.broadcast %60 : vector<8x1xf32> to vector<8x8xf32>
      %62 = arith.cmpi eq, %58, %59 : vector<8x8xi32>
      %cst_30 = arith.constant 0.000000e+00 : f32
      %63 = vector.broadcast %cst_30 : f32 to vector<8x8xf32>
      %64 = arith.select %62, %61, %63 : vector<8x8xi1>, vector<8x8xf32>
      %cst_31 = arith.constant dense<0.000000e+00> : vector<8xf32>
      %65 = vector.multi_reduction <add>, %64, %cst_31 [0] : vector<8x8xf32> to vector<8xf32>
      %66 = vector.shape_cast %65 : vector<8xf32> to vector<1x8xf32>
      %67 = vector.shape_cast %66 : vector<1x8xf32> to vector<1x8xf32>
      %68 = vector.broadcast %67 : vector<1x8xf32> to vector<8x8xf32>
      %69 = arith.cmpf ogt, %68, %61 : vector<8x8xf32>
      %70 = arith.cmpf oeq, %68, %61 : vector<8x8xf32>
      %71 = arith.cmpi slt, %59, %58 : vector<8x8xi32>
      %72 = arith.andi %70, %71 : vector<8x8xi1>
      %73 = arith.ori %69, %72 : vector<8x8xi1>
      %c8_i32_32 = arith.constant 8 : i32
      %74 = vector.broadcast %c8_i32_32 : i32 to vector<8x8xi32>
      %75 = arith.cmpi slt, %59, %74 : vector<8x8xi32>
      %76 = arith.andi %73, %75 : vector<8x8xi1>
      %77 = arith.extui %76 : vector<8x8xi1> to vector<8x8xi32>
      %78 = arith.sitofp %77 : vector<8x8xi32> to vector<8x8xf32>
      %cst_33 = arith.constant dense<0.000000e+00> : vector<8xf32>
      %79 = vector.multi_reduction <add>, %78, %cst_33 [1] : vector<8x8xf32> to vector<8xf32>
      %80 = vector.shape_cast %79 : vector<8xf32> to vector<8x1xf32>
      %cst_34 = arith.constant 3.000000e+00 : f32
      %81 = vector.broadcast %cst_34 : f32 to vector<8x1xf32>
      %82 = arith.cmpf oeq, %80, %81 : vector<8x1xf32>
      %cst_35 = arith.constant 0.000000e+00 : f32
      %83 = vector.broadcast %cst_35 : f32 to vector<8x1xf32>
      %84 = arith.select %82, %57, %83 : vector<8x1xi1>, vector<8x1xf32>
      %85 = vector.shape_cast %84 : vector<8x1xf32> to vector<1x8x1xf32>
      %cst_36 = arith.constant dense<0.000000e+00> : vector<1xf32>
      %86 = vector.multi_reduction <add>, %85, %cst_36 [1, 2] : vector<1x8x1xf32> to vector<1xf32>
      %87 = vector.shape_cast %86 : vector<1xf32> to vector<1x1x1xf32>
      %88 = vector.extract %87[0, 0, 0] : f32 from vector<1x1x1xf32>
      %cst_37 = arith.constant 0.707106769 : f32
      %89 = arith.maximumf %cst_37, %88 : f32
      %90 = math.log %48 : f32
      %91 = arith.divf %90, %89 : f32
      %c0_38 = arith.constant 0 : index
      %c0_39 = arith.constant 0 : index
      %92 = memref.load %arg11[%c0_38, %c0_39] : memref<1x1xf32, #tpu.memory_space<smem>>
      memref.store %91, %arg11[%c0_38, %c0_39] : memref<1x1xf32, #tpu.memory_space<smem>>
    } else {
    }
    %c0_i32_11 = arith.constant 0 : i32
    %20 = arith.subi %c0_i32_11, %arg1 : i32
    %c1_i32 = arith.constant 1 : i32
    %21 = arith.cmpi eq, %arg0, %c1_i32 : i32
    %c0_i32_12 = arith.constant 0 : i32
    %22 = arith.cmpi slt, %20, %c0_i32_12 : i32
    %23 = arith.andi %21, %22 : i1
    %24 = arith.extui %23 : i1 to i32
    %c0_i32_13 = arith.constant 0 : i32
    %25 = arith.cmpi ne, %24, %c0_i32_13 : i32
    scf.if %25 {
      %c0 = arith.constant 0 : index
      %c0_20 = arith.constant 0 : index
      %36 = memref.load %arg11[%c0, %c0_20] : memref<1x1xf32, #tpu.memory_space<smem>>
      %c0_21 = arith.constant 0 : index
      %c0_22 = arith.constant 0 : index
      %37 = vector.load %arg4[%c0_21, %c0_22] : memref<8x128xf32, #tpu.memory_space<vmem>>, vector<8x128xf32>
      %cst = arith.constant 1.000000e+00 : f32
      %38 = vector.broadcast %cst : f32 to vector<8x128xf32>
      %39 = arith.subf %37, %38 : vector<8x128xf32>
      %40 = vector.broadcast %36 : f32 to vector<8x128xf32>
      %41 = arith.mulf %40, %39 : vector<8x128xf32>
      %42 = math.exp %41 : vector<8x128xf32>
      %c0_23 = arith.constant 0 : index
      %c0_24 = arith.constant 0 : index
      %43 = vector.load %arg10[%c0_23, %c0_24] : memref<8x128xf32, #tpu.memory_space<vmem>>, vector<8x128xf32>
      %44 = arith.addf %43, %42 : vector<8x128xf32>
      %c0_25 = arith.constant 0 : index
      %c0_26 = arith.constant 0 : index
      %45 = vector.load %arg10[%c0_25, %c0_26] : memref<8x128xf32, #tpu.memory_space<vmem>>, vector<8x128xf32>
      tpu.vector_store %arg10[%c0_25, %c0_26], %44 {strides = array<i32>} : memref<8x128xf32, #tpu.memory_space<vmem>>, vector<8x128xf32>,
    } else {
    }
    %c1_i32_14 = arith.constant 1 : i32
    %26 = arith.cmpi eq, %arg0, %c1_i32_14 : i32
    %c0_i32_15 = arith.constant 0 : i32
    %27 = arith.cmpi eq, %20, %c0_i32_15 : i32
    %28 = arith.andi %26, %27 : i1
    %29 = arith.extui %28 : i1 to i32
    %c0_i32_16 = arith.constant 0 : i32
    %30 = arith.cmpi ne, %29, %c0_i32_16 : i32
    scf.if %30 {
      %c0 = arith.constant 0 : index
      %c0_20 = arith.constant 0 : index
      %36 = memref.load %arg11[%c0, %c0_20] : memref<1x1xf32, #tpu.memory_space<smem>>
      %c0_21 = arith.constant 0 : index
      %c0_22 = arith.constant 0 : index
      %37 = vector.load %arg4[%c0_21, %c0_22] : memref<8x128xf32, #tpu.memory_space<vmem>>, vector<8x128xf32>
      %cst = arith.constant 1.000000e+00 : f32
      %38 = vector.broadcast %cst : f32 to vector<8x128xf32>
      %39 = arith.subf %37, %38 : vector<8x128xf32>
      %40 = vector.broadcast %36 : f32 to vector<8x128xf32>
      %41 = arith.mulf %40, %39 : vector<8x128xf32>
      %42 = math.exp %41 : vector<8x128xf32>
      %43 = tpu.iota {dimensions = array<i32: 1>} : vector<8x128xi32>
      %c128_i32 = arith.constant 128 : i32
      %44 = arith.muli %20, %c128_i32 : i32
      %45 = vector.broadcast %44 : i32 to vector<8x128xi32>
      %46 = arith.addi %43, %45 : vector<8x128xi32>
      %c16_i32 = arith.constant 16 : i32
      %47 = vector.broadcast %c16_i32 : i32 to vector<8x128xi32>
      %48 = arith.cmpi slt, %46, %47 : vector<8x128xi32>
      %cst_23 = arith.constant 0.000000e+00 : f32
      %49 = vector.broadcast %cst_23 : f32 to vector<8x128xf32>
      %50 = arith.select %48, %42, %49 : vector<8x128xi1>, vector<8x128xf32>
      %c0_24 = arith.constant 0 : index
      %c0_25 = arith.constant 0 : index
      %51 = vector.load %arg10[%c0_24, %c0_25] : memref<8x128xf32, #tpu.memory_space<vmem>>, vector<8x128xf32>
      %52 = arith.addf %51, %50 : vector<8x128xf32>
      %c0_26 = arith.constant 0 : index
      %c0_27 = arith.constant 0 : index
      %53 = vector.load %arg10[%c0_26, %c0_27] : memref<8x128xf32, #tpu.memory_space<vmem>>, vector<8x128xf32>
      tpu.vector_store %arg10[%c0_26, %c0_27], %52 {strides = array<i32>} : memref<8x128xf32, #tpu.memory_space<vmem>>, vector<8x128xf32>,
    } else {
    }
    %c1_i32_17 = arith.constant 1 : i32
    %31 = arith.cmpi eq, %arg0, %c1_i32_17 : i32
    %c0_i32_18 = arith.constant 0 : i32
    %32 = arith.cmpi eq, %arg1, %c0_i32_18 : i32
    %33 = arith.andi %31, %32 : i1
    %34 = arith.extui %33 : i1 to i32
    %c0_i32_19 = arith.constant 0 : i32
    %35 = arith.cmpi ne, %34, %c0_i32_19 : i32
    scf.if %35 {
      %c0 = arith.constant 0 : index
      %c0_20 = arith.constant 0 : index
      %36 = memref.load %arg11[%c0, %c0_20] : memref<1x1xf32, #tpu.memory_space<smem>>
      %37 = tpu.iota {dimensions = array<i32: 0>} : vector<8x1xi32>
      %c8_i32 = arith.constant 8 : i32
      %38 = vector.broadcast %c8_i32 : i32 to vector<8x1xi32>
      %39 = arith.cmpi slt, %37, %38 : vector<8x1xi32>
      %c0_21 = arith.constant 0 : index
      %c0_22 = arith.constant 0 : index
      %40 = vector.load %arg8[%c0_21, %c0_22] : memref<8x128xf32, #tpu.memory_space<vmem>>, vector<8x128xf32>
      %cst = arith.constant dense<0.000000e+00> : vector<8xf32>
      %41 = vector.multi_reduction <add>, %40, %cst [1] : vector<8x128xf32> to vector<8xf32>
      %42 = vector.shape_cast %41 : vector<8xf32> to vector<8x1xf32>
      %c0_23 = arith.constant 0 : index
      %c0_24 = arith.constant 0 : index
      %43 = vector.load %arg9[%c0_23, %c0_24] : memref<8x128xf32, #tpu.memory_space<vmem>>, vector<8x128xf32>
      %cst_25 = arith.constant dense<0.000000e+00> : vector<8xf32>
      %44 = vector.multi_reduction <add>, %43, %cst_25 [1] : vector<8x128xf32> to vector<8xf32>
      %45 = vector.shape_cast %44 : vector<8xf32> to vector<8x1xf32>
      %46 = math.log %45 : vector<8x1xf32>
      %cst_26 = arith.constant 1.000000e+00 : f32
      %47 = vector.broadcast %cst_26 : f32 to vector<8x1xf32>
      %48 = arith.addf %47, %46 : vector<8x1xf32>
      %c0_27 = arith.constant 0 : index
      %c0_28 = arith.constant 0 : index
      %49 = vector.load %arg10[%c0_27, %c0_28] : memref<8x128xf32, #tpu.memory_space<vmem>>, vector<8x128xf32>
      %cst_29 = arith.constant dense<0.000000e+00> : vector<8xf32>
      %50 = vector.multi_reduction <add>, %49, %cst_29 [1] : vector<8x128xf32> to vector<8xf32>
      %51 = vector.shape_cast %50 : vector<8xf32> to vector<8x1xf32>
      %52 = math.log %51 : vector<8x1xf32>
      %53 = vector.broadcast %36 : f32 to vector<8x1xf32>
      %54 = arith.addf %53, %52 : vector<8x1xf32>
      %55 = vector.broadcast %36 : f32 to vector<8x1xf32>
      %56 = arith.mulf %55, %42 : vector<8x1xf32>
      %57 = arith.subf %54, %56 : vector<8x1xf32>
      %cst_30 = arith.constant 1.000000e+00 : f32
      %58 = vector.broadcast %cst_30 : f32 to vector<8x1xf32>
      %59 = arith.mulf %58, %57 : vector<8x1xf32>
      %60 = arith.subf %48, %42 : vector<8x1xf32>
      %61 = arith.addf %59, %60 : vector<8x1xf32>
      %cst_31 = arith.constant 0.000000e+00 : f32
      %62 = vector.broadcast %cst_31 : f32 to vector<8x1xf32>
      %63 = arith.select %39, %61, %62 : vector<8x1xi1>, vector<8x1xf32>
      %64 = vector.shape_cast %63 : vector<8x1xf32> to vector<1x8x1xf32>
      %cst_32 = arith.constant dense<0.000000e+00> : vector<1xf32>
      %65 = vector.multi_reduction <add>, %64, %cst_32 [1, 2] : vector<1x8x1xf32> to vector<1xf32>
      %66 = vector.shape_cast %65 : vector<1xf32> to vector<1x1x1xf32>
      %67 = vector.extract %66[0, 0, 0] : f32 from vector<1x1x1xf32>
      %cst_33 = arith.constant 8.000000e+00 : f32
      %68 = arith.divf %67, %cst_33 : f32
      %cst_34 = arith.constant 2.000000e+00 : f32
      %69 = arith.divf %68, %cst_34 : f32
      %c0_35 = arith.constant 0 : index
      %c0_36 = arith.constant 0 : index
      %70 = memref.load %arg5[%c0_35, %c0_36] : memref<1x1xf32, #tpu.memory_space<smem>>
      memref.store %69, %arg5[%c0_35, %c0_36] : memref<1x1xf32, #tpu.memory_space<smem>>
      %c0_37 = arith.constant 0 : index
      %c0_38 = arith.constant 0 : index
      %71 = memref.load %arg6[%c0_37, %c0_38] : memref<1x1xf32, #tpu.memory_space<smem>>
      memref.store %36, %arg6[%c0_37, %c0_38] : memref<1x1xf32, #tpu.memory_space<smem>>
    } else {
    }
    return
  }
  func.func @transform_0(%arg0: i32, %arg1: i32) -> (i32, i32) {
    %c0_i32 = arith.constant 0 : i32
    %c0_i32_0 = arith.constant 0 : i32
    %c0_i32_1 = arith.constant 0 : i32
    return %c0_i32, %c0_i32_0 : i32, i32
  }
  func.func @transform_1(%arg0: i32, %arg1: i32) -> (i32, i32) {
    %c0_i32 = arith.constant 0 : i32
    %c0_i32_0 = arith.constant 0 : i32
    %c0_i32_1 = arith.constant 0 : i32
    return %c0_i32, %c0_i32_0 : i32, i32
  }
  func.func @transform_2(%arg0: i32, %arg1: i32) -> (i32, i32) {
    %c2_i32 = arith.constant 2 : i32
    %0 = arith.muli %c2_i32, %arg1 : i32
    %c0_i32 = arith.constant 0 : i32
    %1 = arith.subi %c0_i32, %0 : i32
    %2 = arith.muli %arg0, %1 : i32
    %3 = arith.addi %arg1, %2 : i32
    %c0_i32_0 = arith.constant 0 : i32
    %c0_i32_1 = arith.constant 0 : i32
    return %c0_i32_0, %3 : i32, i32
  }
  func.func @transform_3(%arg0: i32, %arg1: i32) -> (i32, i32) {
    %c0_i32 = arith.constant 0 : i32
    %c0_i32_0 = arith.constant 0 : i32
    %c0_i32_1 = arith.constant 0 : i32
    return %c0_i32, %c0_i32_0 : i32, i32
  }
  func.func @transform_4(%arg0: i32, %arg1: i32) -> (i32, i32) {
    %c0_i32 = arith.constant 0 : i32
    %c0_i32_0 = arith.constant 0 : i32
    %c0_i32_1 = arith.constant 0 : i32
    return %c0_i32, %c0_i32_0 : i32, i32
  }
}

</mosaic_0001>

<llo_original>
// kernel: tpu_custom_call.1
$region0: #{tpu_custom_call.1}
  #allocation0 [shape = 'u32[]', space=smem, size = 0x4, offset = 0x4, fixed_abs, tag = 'smem constant byte address 0x4 - core index']
  #allocation1 [shape = 'u32[144,128]{1,0:T(1,128)}', space=vmem, size = 0x12000, scoped, tag = 'internal scratch']
  #allocation2 [shape = 'f32[8,128]{1,0:T(8,128)}', space=vmem, size = 0x1000, scoped, tag = 'scratch operand']
  #allocation3 [shape = 'f32[8,128]{1,0:T(8,128)}', space=vmem, size = 0x1000, scoped, tag = 'scratch operand']
  #allocation4 [shape = 'f32[8,128]{1,0:T(8,128)}', space=vmem, size = 0x1000, scoped, tag = 'scratch operand']
  #allocation5 [shape = 'f32[8,128]{1,0:T(8,128)}', space=vmem, size = 0x1000, scoped, tag = 'scratch operand']
  #allocation6 [shape = 'f32[1,1]{1,0:T(1,128)}', space=smem, size = 0x200, scoped, tag = 'scratch operand']
  #allocation7 [shape = 'f32[1,1]{1,0:T(1,128)S(6)}', space=smem, size = 0x200, scoped, tag = 'scoped memory for tpu_custom_call.1']
  %s0 = inlined_call_operand.<no memory space> [shape: f32[1,1], index: 0, kind: input, shape index: {}]
  %s1 = inlined_call_operand.vmem [shape: s32[8,1], index: 1, kind: input, shape index: {}]
  %s2 = inlined_call_operand.vmem [shape: f32[8,128], index: 2, kind: input, shape index: {}]
  %s3 = inlined_call_operand.hbm [shape: f32[1,1], index: 3, kind: output, shape index: {0}]
  %s4 = inlined_call_operand.hbm [shape: f32[1,1], index: 4, kind: output, shape index: {1}]
  %5 = xla_tuple %s3, %s4
  %s6 = sld [smem:[#allocation0]]
  $region77: #{tpu_custom_call.1} parent=0
    _
  %s8 = ssub.s32 1, %s6
  %s9 = scalar_select 0, %s8, %s6
  %10 = sst [smem:[#allocation7]] %s0
  $region1: #{tpu_custom_call.1} parent=0
    #allocation8 [shape = 'u8[512]{0}', space=smem, size = 0x200, scoped, tag = 'output window, operand 0, single buffered']
    #allocation9 [shape = 's32[2]{0}', space=sflag, size = 0x8, scoped, tag = 'scoped memory for tpu_custom_call.1']
    #allocation10 [shape = 'u8[512]{0}', space=smem, size = 0x200, scoped, tag = 'output window, operand 1, single buffered']
    #allocation11 [shape = 's32[1]{0}', space=sflag, size = 0x4, scoped, tag = 'scoped memory for tpu_custom_call.1']
    %11 = vsyncpa [#allocation9], 0
    %12 = vsyncpa [#allocation11], 0
    loop: start=0, step=1, limit=4
    $region2: #{tpu_custom_call.1} parent=1 // loop_pre_header
      _
    $region3: #{tpu_custom_call.1} parent=1 // loop_header
      %s14 = sphi 0, %s18
      %p15 = scmp.ge.s32.totalorder %s14, 4
      %s21 = sphi 0, %s33
      %s22 = sphi 0, %s29
      %s23 = sphi 0, %s21
      %s24 = sphi 0, %s22
      %s25 = sphi 0, %s23
      %s26 = sphi 0, %s24
      %s34 = sphi 0, %s34
      %s36 = sphi 0, %s34
      %s37 = sphi 0, %s36
      %s51 = sphi 0, %s37
      %s55 = sphi 0, %s55
      %s57 = sphi 0, %s55
      %s58 = sphi 0, %s57
      %s72 = sphi 0, %s58
      %s86 = sphi 0, %s88
      %s89 = sphi 0, %s86
      %s90 = sphi 0, %s89
      %s106 = sphi 0, %s90
      %s110 = sphi 0, %s110
      %s112 = sphi 0, %s110
      %s113 = sphi 0, %s112
      %s127 = sphi 0, %s113
      %s131 = sphi 0, %s131
      %s133 = sphi 0, %s131
      %s134 = sphi 0, %s133
      %s148 = sphi 0, %s134
    $region4: #{tpu_custom_call.1} parent=1 // loop_header_branch
      %17 = sbr.rel (%p15) target = $region8
    $region5: #{tpu_custom_call.1} parent=1 // loop_body
      %s19 = ssub.s32 %s14, 1
      %s20 = ssub.s32 %s14, 2
      %s27 = sadd.s32 1, %s22
      %p28 = scmp.ge.s32.totalorder %s27, 1
      %s29 = scalar_select %p28, 0, %s27
      %s30 = sadd.s32 1, %s21
      %s31 = scalar_select %p28, %s30, %s21
      %p32 = scmp.ge.s32.totalorder %s31, 2
      %s33 = scalar_select %p32, 0, %s31
      %s35 = sadd.s32 %s34, 1
      %p38 = scmp.eq.s32.totalorder %s14, 1
      %p39 = scmp.ne.s32.totalorder %s34, %s36
      %p40 = scmp.eq.s32.totalorder %s14, 0
      %p41 = por %p39, %p40
      %p42 = scmp.ne.s32.totalorder %s34, %s36
      %p43 = scmp.eq.s32.totalorder %s19, 1
      %p44 = por %p42, %p43
      %p45 = scmp.ne.s32.totalorder %s36, %s37
      %p46 = scmp.eq.s32.totalorder %s19, 0
      %p47 = por %p45, %p46
      %p48 = scmp.ne.s32.totalorder %s36, %s37
      %p49 = scmp.eq.s32.totalorder %s20, 1
      %p50 = por %p48, %p49
      %p52 = scmp.ne.s32.totalorder %s37, %s51
      %p53 = scmp.eq.s32.totalorder %s20, 0
      %p54 = por %p52, %p53
      %s56 = sadd.s32 %s55, 1
      %p59 = scmp.eq.s32.totalorder %s14, 1
      %p60 = scmp.ne.s32.totalorder %s55, %s57
      %p61 = scmp.eq.s32.totalorder %s14, 0
      %p62 = por %p60, %p61
      %p63 = scmp.ne.s32.totalorder %s55, %s57
      %p64 = scmp.eq.s32.totalorder %s19, 1
      %p65 = por %p63, %p64
      %p66 = scmp.ne.s32.totalorder %s57, %s58
      %p67 = scmp.eq.s32.totalorder %s19, 0
      %p68 = por %p66, %p67
      %p69 = scmp.ne.s32.totalorder %s57, %s58
      %p70 = scmp.eq.s32.totalorder %s20, 1
      %p71 = por %p69, %p70
      %p73 = scmp.ne.s32.totalorder %s58, %s72
      %p74 = scmp.eq.s32.totalorder %s20, 0
      %p75 = por %p73, %p74
      %s76 = smul.u32 %s22, 2
      %s77 = ssub.s32 0, %s76
      %s78 = smul.u32 %s21, %s77
      %s79 = sadd.s32 %s22, %s78
      %s80 = smul.u32 %s29, 2
      %s81 = ssub.s32 0, %s80
      %s82 = smul.u32 %s33, %s81
      %s83 = sadd.s32 %s29, %s82
      %s84 = ssub.s32 %s79, %s83
      %p85 = scmp.eq.s32.totalorder %s84, 0
      %s87 = sadd.s32 %s86, 1
      %s88 = scalar_select %p85, %s86, %s87
      %p91 = pneg %p85
      %p92 = scmp.eq.s32.totalorder %s14, 1
      %p93 = por %p91, %p92
      %p94 = scmp.ne.s32.totalorder %s86, %s89
      %p95 = scmp.eq.s32.totalorder %s14, 0
      %p96 = por %p94, %p95
      %p97 = scmp.ne.s32.totalorder %s86, %s89
      %p98 = scmp.eq.s32.totalorder %s19, 1
      %p99 = por %p97, %p98
      %p100 = scmp.ne.s32.totalorder %s89, %s90
      %p101 = scmp.eq.s32.totalorder %s19, 0
      %p102 = por %p100, %p101
      %p103 = scmp.ne.s32.totalorder %s89, %s90
      %p104 = scmp.eq.s32.totalorder %s20, 1
      %p105 = por %p103, %p104
      %p107 = scmp.ne.s32.totalorder %s90, %s106
      %p108 = scmp.eq.s32.totalorder %s20, 0
      %p109 = por %p107, %p108
      %s111 = sadd.s32 %s110, 1
      %p114 = scmp.eq.s32.totalorder %s14, 1
      %p115 = scmp.ne.s32.totalorder %s110, %s112
      %p116 = scmp.eq.s32.totalorder %s14, 0
      %p117 = por %p115, %p116
      %p118 = scmp.ne.s32.totalorder %s110, %s112
      %p119 = scmp.eq.s32.totalorder %s19, 1
      %p120 = por %p118, %p119
      %p121 = scmp.ne.s32.totalorder %s112, %s113
      %p122 = scmp.eq.s32.totalorder %s19, 0
      %p123 = por %p121, %p122
      %p124 = scmp.ne.s32.totalorder %s112, %s113
      %p125 = scmp.eq.s32.totalorder %s20, 1
      %p126 = por %p124, %p125
      %p128 = scmp.ne.s32.totalorder %s113, %s127
      %p129 = scmp.eq.s32.totalorder %s20, 0
      %p130 = por %p128, %p129
      %s132 = sadd.s32 %s131, 1
      %p135 = scmp.eq.s32.totalorder %s14, 1
      %p136 = scmp.ne.s32.totalorder %s131, %s133
      %p137 = scmp.eq.s32.totalorder %s14, 0
      %p138 = por %p136, %p137
      %p139 = scmp.ne.s32.totalorder %s131, %s133
      %p140 = scmp.eq.s32.totalorder %s19, 1
      %p141 = por %p139, %p140
      %p142 = scmp.ne.s32.totalorder %s133, %s134
      %p143 = scmp.eq.s32.totalorder %s19, 0
      %p144 = por %p142, %p143
      %p145 = scmp.ne.s32.totalorder %s133, %s134
      %p146 = scmp.eq.s32.totalorder %s20, 1
      %p147 = por %p145, %p146
      %p149 = scmp.ne.s32.totalorder %s134, %s148
      %p150 = scmp.eq.s32.totalorder %s20, 0
      %p151 = por %p149, %p150
      %p152 = scmp.le.s32.totalorder 1, %s14
      %p153 = scmp.lt.s32.totalorder %s14, 3
      %p154 = pnand %p152, %p153
      %p155 = pneg %p154
      // Predicated region
      $region9: #{tpu_custom_call.1} parent=5 // pred_check
        _
      $region10: #{tpu_custom_call.1} parent=5 // pred_check_branch
        %157 = sbr.rel (%p154) target = $region12
      $region11: #{tpu_custom_call.1} parent=5 // pred_region
        %s158 = ssub.s32 %s14, 1
        // Predicated region
        $region13: #{tpu_custom_call.1} parent=11 // pred_check
          %p159 = pneg %p47
        $region14: #{tpu_custom_call.1} parent=11 // pred_check_branch
          %161 = sbr.rel (%p159) target = $region16
        $region15: #{tpu_custom_call.1} parent=11 // pred_region
          _
        $region16: #{tpu_custom_call.1} parent=11 // pred_fallthru
          _
        // Predicated region
        $region17: #{tpu_custom_call.1} parent=11 // pred_check
          %p162 = pneg %p68
        $region18: #{tpu_custom_call.1} parent=11 // pred_check_branch
          %164 = sbr.rel (%p162) target = $region20
        $region19: #{tpu_custom_call.1} parent=11 // pred_region
          _
        $region20: #{tpu_custom_call.1} parent=11 // pred_fallthru
          _
      $region12: #{tpu_custom_call.1} parent=5 // pred_fallthru
        _
      %p165 = scmp.lt.s32.totalorder %s14, 2
      // Predicated region
      $region21: #{tpu_custom_call.1} parent=5 // pred_check
        %p166 = pneg %p165
      $region22: #{tpu_custom_call.1} parent=5 // pred_check_branch
        %168 = sbr.rel (%p166) target = $region24
      $region23: #{tpu_custom_call.1} parent=5 // pred_region
        // Predicated region
        $region25: #{tpu_custom_call.1} parent=23 // pred_check
          %p169 = pneg %p96
        $region26: #{tpu_custom_call.1} parent=23 // pred_check_branch
          %171 = sbr.rel (%p169) target = $region28
        $region27: #{tpu_custom_call.1} parent=23 // pred_region
          %s172 = smul.u32 %s22, 2
          %s173 = ssub.s32 0, %s172
          %s174 = smul.u32 %s21, %s173
          %s175 = sadd.s32 %s22, %s174
          %p176 = scmp.lt.s32.totalorder %s175, 0
          %s177 = scalar_select %p176, %s175, 0
          %s178 = smul.addr %s177, 8
          %s179 = scalar_lea.vmem %s2, %s178
          %s180 = smul.u32 %s22, 2
          %s181 = ssub.s32 0, %s180
          %s182 = smul.u32 %s21, %s181
          %s183 = sadd.s32 %s22, %s182
        $region28: #{tpu_custom_call.1} parent=23 // pred_fallthru
          _
      $region24: #{tpu_custom_call.1} parent=5 // pred_fallthru
        _
      %p184 = scmp.le.s32.totalorder 1, %s14
      %p185 = scmp.lt.s32.totalorder %s14, 3
      %p186 = pnand %p184, %p185
      %p187 = pneg %p186
      // Predicated region
      $region29: #{tpu_custom_call.1} parent=5 // pred_check
        _
      $region30: #{tpu_custom_call.1} parent=5 // pred_check_branch
        %189 = sbr.rel (%p186) target = $region32
      $region31: #{tpu_custom_call.1} parent=5 // pred_region
        %s190 = ssub.s32 %s14, 1
        %p191 = pneg %p47
        %p192 = pneg %p44
        %p193 = pneg %p68
        %p194 = pneg %p65
        %s195 = smul.u32 %s24, 2
        %s196 = ssub.s32 0, %s195
        %s197 = smul.u32 %s23, %s196
        %s198 = sadd.s32 %s24, %s197
        %p199 = scmp.lt.s32.totalorder %s198, 0
        %s200 = scalar_select %p199, %s198, 0
        %s201 = smul.addr %s200, 8
        %s202 = scalar_lea.vmem %s2, %s201
        %p203 = pneg %p102
        %p204 = pneg %p99
        %p205 = pneg %p123
        %p206 = pneg %p120
        %p207 = pneg %p144
        %p208 = pneg %p141
        %s209 = smul.u32 %s24, 2
        %s210 = ssub.s32 0, %s209
        %s211 = smul.u32 %s23, %s210
        %s212 = sadd.s32 %s24, %s211
        %p213 = scmp.lt.s32.totalorder %s212, 0
        %s214 = scalar_select %p213, %s212, 0
        %s215 = smul.addr %s214, 8
        %s216 = scalar_lea.vmem %s2, %s215
        %s217 = smul.u32 %s24, 2
        %s218 = ssub.s32 0, %s217
        %s219 = smul.u32 %s23, %s218
        %s220 = sadd.s32 %s24, %s219
        %p221 = scmp.eq.s32.totalorder %s23, 0
        %p222 = scmp.eq.s32.totalorder %s24, 0
        %p223 = pnand %p221, %p222
        %p224 = pneg %p223
        // Predicated region
        $region33: #{tpu_custom_call.1} parent=31 // pred_check
          _
        $region34: #{tpu_custom_call.1} parent=31 // pred_check_branch
          %226 = sbr.rel (%p223) target = $region36
        $region35: #{tpu_custom_call.1} parent=31 // pred_region
          %227 = vst [vmem:[#allocation2] sm:$0xff] 0.0
          %228 = vst [vmem:[#allocation3] sm:$0xff] 0.0
          %229 = vst [vmem:[#allocation4] sm:$0xff] 0.0
          %230 = vst [vmem:[#allocation5] sm:$0xff] 0.0
        $region36: #{tpu_custom_call.1} parent=31 // pred_fallthru
          _
        %p231 = scmp.lt.s32.totalorder %s24, 0
        %p232 = pnand %p221, %p231
        %p233 = pneg %p232
        // Predicated region
        $region37: #{tpu_custom_call.1} parent=31 // pred_check
          _
        $region38: #{tpu_custom_call.1} parent=31 // pred_check_branch
          %235 = sbr.rel (%p232) target = $region40
        $region39: #{tpu_custom_call.1} parent=31 // pred_region
          %v236 = vld [vmem:[%s216] sm:$0xff]
          %s237 = sld [smem:[#allocation7]]
          %v238 = vld [vmem:[%s1] sm:$0xff]
          %v239 = vlaneseq
          %v240 = vand.u32 %v239, 127
          %s241 = smul.u32 %s24, 128
          %v242 = vstv %s241
          %v243 = vadd.s32 %v240, %v242
          %244 = vset.pattern.permute.xlu0 0
          %245 = vperm.xlu0 %244, %v238
          %v246 = vpop.permute.xlu0 %245
          %vm247 = vcmp.eq.s32.totalorder %v243, %v246
          %v248 = vsel %vm247, 1, 0
          %v249 = vcvt.s32.f32 %v248
          %v250 = vsub.f32 %v236, 1.0
          %v251 = vmul.f32 %v250, 1.442695
          %v252 = vpow.pop %v251
          %v253 = vstv %s237
          %v254 = vmul.f32 %v253, %v236
          %v255 = vmul.f32 %v254, 1.442695
          %v256 = vpow.pop %v255
          %v257 = vld [vmem:[#allocation4] sm:$0xff]
          %v258 = vadd.f32 %v257, %v252
          %259 = vst [vmem:[#allocation4] sm:$0xff] %v258
          %v260 = vsub.f32 1.0, %v249
          %v261 = vmul.f32 %v256, %v260
          %v262 = vld [vmem:[#allocation2] sm:$0xff]
          %v263 = vadd.f32 %v262, %v261
          %264 = vst [vmem:[#allocation2] sm:$0xff] %v263
          %v265 = vmul.f32 %v236, %v249
          %v266 = vld [vmem:[#allocation3] sm:$0xff]
          %v267 = vadd.f32 %v266, %v265
          %268 = vst [vmem:[#allocation3] sm:$0xff] %v267
        $region40: #{tpu_custom_call.1} parent=31 // pred_fallthru
          _
        // Predicated region
        $region41: #{tpu_custom_call.1} parent=31 // pred_check
          _
        $region42: #{tpu_custom_call.1} parent=31 // pred_check_branch
          %270 = sbr.rel (%p223) target = $region44
        $region43: #{tpu_custom_call.1} parent=31 // pred_region
          %v271 = vld [vmem:[%s216] sm:$0xff]
          %s272 = sld [smem:[#allocation7]]
          %v273 = vld [vmem:[%s1] sm:$0xff]
          %v274 = vlaneseq
          %v275 = vand.u32 %v274, 127
          %s276 = smul.u32 %s24, 128
          %v277 = vstv %s276
          %v278 = vadd.s32 %v275, %v277
          %279 = vset.pattern.permute.xlu0 0
          %280 = vperm.xlu0 %279, %v273
          %v281 = vpop.permute.xlu0 %280
          %vm282 = vcmp.eq.s32.totalorder %v278, %v281
          %v283 = vsel %vm282, 1, 0
          %v284 = vcvt.s32.f32 %v283
          %v285 = vsub.f32 %v271, 1.0
          %v286 = vmul.f32 %v285, 1.442695
          %v287 = vpow.pop %v286
          %v288 = vstv %s272
          %v289 = vmul.f32 %v288, %v271
          %v290 = vmul.f32 %v289, 1.442695
          %v291 = vpow.pop %v290
          %vm292 = vcmp.lt.s32.totalorder %v278, 16
          %v293 = vsel %vm292, 1, 0
          %v294 = vcvt.s32.f32 %v293
          %v295 = vmul.f32 %v287, %v294
          %v296 = vmul.f32 %v291, %v294
          %v297 = vld [vmem:[#allocation4] sm:$0xff]
          %v298 = vadd.f32 %v297, %v295
          %299 = vst [vmem:[#allocation4] sm:$0xff] %v298
          %v300 = vsub.f32 1.0, %v284
          %v301 = vmul.f32 %v296, %v300
          %v302 = vld [vmem:[#allocation2] sm:$0xff]
          %v303 = vadd.f32 %v302, %v301
          %304 = vst [vmem:[#allocation2] sm:$0xff] %v303
          %v305 = vmul.f32 %v271, %v284
          %v306 = vld [vmem:[#allocation3] sm:$0xff]
          %v307 = vadd.f32 %v306, %v305
          %308 = vst [vmem:[#allocation3] sm:$0xff] %v307
          %v309 = vlaneseq
          %v310 = vshrl.u32 %v309, 7
          %vm311 = vcmp.lt.s32.totalorder %v310, 8
          %v312 = vld [vmem:[#allocation2] sm:$0xff]
          %313 = vadd.xlane.f32.xlu0 %v312
          %v314 = vpop.xlane.xlu0 %313
          %v315 = vsel %vm311, %v314, 0.0
          %vm316 = vcmask 7168
          %v317 = vsel %vm316, %v315, 0.0
          %318 = vadd.xlane.f32.xlu0 %v317
          %v319 = vpop.xlane.xlu0 %318
          %v320 = vrot.slane %v319, 4
          %v321 = vadd.f32 %v319, %v320
          %v322 = vrot.slane %v321, 2
          %v323 = vadd.f32 %v321, %v322
          %v324 = vrot.slane %v323, 1
          %v325 = vadd.f32 %v323, %v324
          %s326 = vtos %v325
          %v327 = vrcp.pop 8.0
          %s328 = vtos %v327
          %s329 = smul.f32 %s326, %s328
          %v330 = vld [vmem:[#allocation3] sm:$0xff]
          %331 = vadd.xlane.f32.xlu0 %v330
          %v332 = vpop.xlane.xlu0 %331
          %v333 = vmax.f32 %v332, -0.9999999
          %v334 = vmin.f32 %v333, 0.9999999
          %v335 = vsel %vm311, %v334, -2.0
          %vm336 = vcmp.eq.s32.totalorder %v310, %v275
          %v337 = vsel %vm336, %v335, 0.0
          %vm338 = vcmask 64512
          %v339 = vsel %vm338, %v337, 0.0
          %v340 = vrot.slane %v339, 4
          %v341 = vadd.f32 %v339, %v340
          %v342 = vrot.slane %v341, 2
          %v343 = vadd.f32 %v341, %v342
          %v344 = vrot.slane %v343, 1
          %v345 = vadd.f32 %v343, %v344
          %vm346 = vcmp.gt.f32.partialorder %v345, %v335
          %vm347 = vcmp.eq.f32.partialorder %v345, %v335
          %vm348 = vcmp.lt.s32.totalorder %v275, %v310
          %vm349 = vmand %vm347, %vm348
          %vm350 = vmor %vm346, %vm349
          %vm351 = vcmp.lt.s32.totalorder %v275, 8
          %vm352 = vmand %vm350, %vm351
          %v353 = vsel %vm352, 1, 0
          %v354 = vcvt.s32.f32 %v353
          %v355 = vsel %vm338, %v354, 0.0
          %356 = vadd.xlane.f32.xlu0 %v355
          %v357 = vpop.xlane.xlu0 %356
          %vm358 = vcmp.eq.f32.partialorder %v357, 3.0
          %v359 = vsel %vm358, %v335, 0.0
          %v360 = vsel %vm316, %v359, 0.0
          %361 = vadd.xlane.f32.xlu0 %v360
          %v362 = vpop.xlane.xlu0 %361
          %v363 = vrot.slane %v362, 4
          %v364 = vadd.f32 %v362, %v363
          %v365 = vrot.slane %v364, 2
          %v366 = vadd.f32 %v364, %v365
          %v367 = vrot.slane %v366, 1
          %v368 = vadd.f32 %v366, %v367
          %s369 = vtos %v368
          %s370 = smax.f32 %s369, 0.70710677
          %v371 = vstv %s329
          %v372 = vlog2.pop %v371
          %v373 = vmul.f32 %v372, 0.6931472
          %s374 = vtos %v373
          %v375 = vstv %s370
          %v376 = vrcp.pop %v375
          %s377 = vtos %v376
          %s378 = smul.f32 %s374, %s377
          %s379 = scalar_lea.smem [#allocation6], 0
          %380 = sst [smem:[%s379]] %s378
        $region44: #{tpu_custom_call.1} parent=31 // pred_fallthru
          _
        %s381 = ssub.s32 0, %s24
        %p382 = scmp.eq.s32.totalorder %s23, 1
        %p383 = scmp.lt.s32.totalorder %s381, 0
        %p384 = pnand %p382, %p383
        %p385 = pneg %p384
        // Predicated region
        $region45: #{tpu_custom_call.1} parent=31 // pred_check
          _
        $region46: #{tpu_custom_call.1} parent=31 // pred_check_branch
          %387 = sbr.rel (%p384) target = $region48
        $region47: #{tpu_custom_call.1} parent=31 // pred_region
          %s388 = sld [smem:[#allocation6]]
          %v389 = vld [vmem:[%s216] sm:$0xff]
          %v390 = vsub.f32 %v389, 1.0
          %v391 = vstv %s388
          %v392 = vmul.f32 %v391, %v390
          %v393 = vmul.f32 %v392, 1.442695
          %v394 = vpow.pop %v393
          %v395 = vld [vmem:[#allocation5] sm:$0xff]
          %v396 = vadd.f32 %v395, %v394
          %397 = vst [vmem:[#allocation5] sm:$0xff] %v396
        $region48: #{tpu_custom_call.1} parent=31 // pred_fallthru
          _
        %p398 = scmp.eq.s32.totalorder %s381, 0
        %p399 = pnand %p382, %p398
        %p400 = pneg %p399
        // Predicated region
        $region49: #{tpu_custom_call.1} parent=31 // pred_check
          _
        $region50: #{tpu_custom_call.1} parent=31 // pred_check_branch
          %402 = sbr.rel (%p399) target = $region52
        $region51: #{tpu_custom_call.1} parent=31 // pred_region
          %s403 = sld [smem:[#allocation6]]
          %v404 = vld [vmem:[%s216] sm:$0xff]
          %v405 = vsub.f32 %v404, 1.0
          %v406 = vstv %s403
          %v407 = vmul.f32 %v406, %v405
          %v408 = vmul.f32 %v407, 1.442695
          %v409 = vpow.pop %v408
          %v410 = vlaneseq
          %v411 = vand.u32 %v410, 127
          %s412 = smul.u32 %s381, 128
          %v413 = vstv %s412
          %v414 = vadd.s32 %v411, %v413
          %vm415 = vcmp.lt.s32.totalorder %v414, 16
          %v416 = vsel %vm415, %v409, 0.0
          %v417 = vld [vmem:[#allocation5] sm:$0xff]
          %v418 = vadd.f32 %v417, %v416
          %419 = vst [vmem:[#allocation5] sm:$0xff] %v418
        $region52: #{tpu_custom_call.1} parent=31 // pred_fallthru
          _
        %p420 = pnand %p382, %p222
        %p421 = pneg %p420
        // Predicated region
        $region53: #{tpu_custom_call.1} parent=31 // pred_check
          _
        $region54: #{tpu_custom_call.1} parent=31 // pred_check_branch
          %423 = sbr.rel (%p420) target = $region56
        $region55: #{tpu_custom_call.1} parent=31 // pred_region
          %s424 = sld [smem:[#allocation6]]
          %v425 = vlaneseq
          %v426 = vshrl.u32 %v425, 7
          %vm427 = vcmp.lt.s32.totalorder %v426, 8
          %v428 = vld [vmem:[#allocation3] sm:$0xff]
          %429 = vadd.xlane.f32.xlu0 %v428
          %v430 = vpop.xlane.xlu0 %429
          %v431 = vld [vmem:[#allocation4] sm:$0xff]
          %432 = vadd.xlane.f32.xlu0 %v431
          %v433 = vpop.xlane.xlu0 %432
          %v434 = vlog2.pop %v433
          %v435 = vmul.f32 %v434, 0.6931472
          %v436 = vadd.f32 %v435, 1.0
          %v437 = vld [vmem:[#allocation5] sm:$0xff]
          %438 = vadd.xlane.f32.xlu0 %v437
          %v439 = vpop.xlane.xlu0 %438
          %v440 = vlog2.pop %v439
          %v441 = vmul.f32 %v440, 0.6931472
          %v442 = vstv %s424
          %v443 = vadd.f32 %v442, %v441
          %v444 = vmul.f32 %v442, %v430
          %v445 = vsub.f32 %v443, %v444
          %v446 = vsub.f32 %v436, %v430
          %v447 = vadd.f32 %v445, %v446
          %v448 = vsel %vm427, %v447, 0.0
          %vm449 = vcmask 7168
          %v450 = vsel %vm449, %v448, 0.0
          %451 = vadd.xlane.f32.xlu0 %v450
          %v452 = vpop.xlane.xlu0 %451
          %v453 = vrot.slane %v452, 4
          %v454 = vadd.f32 %v452, %v453
          %v455 = vrot.slane %v454, 2
          %v456 = vadd.f32 %v454, %v455
          %v457 = vrot.slane %v456, 1
          %v458 = vadd.f32 %v456, %v457
          %s459 = vtos %v458
          %v460 = vrcp.pop 8.0
          %s461 = vtos %v460
          %s462 = smul.f32 %s459, %s461
          %v463 = vrcp.pop 2.0
          %s464 = vtos %v463
          %s465 = smul.f32 %s462, %s464
          %s466 = scalar_lea.smem [#allocation8], 0
          %467 = sst [smem:[%s466]] %s465
          %s468 = scalar_lea.smem [#allocation10], 0
          %469 = sst [smem:[%s468]] %s424
        $region56: #{tpu_custom_call.1} parent=31 // pred_fallthru
          _
        // Predicated region
        $region57: #{tpu_custom_call.1} parent=31 // pred_check
          %p470 = pneg %p120
        $region58: #{tpu_custom_call.1} parent=31 // pred_check_branch
          %472 = sbr.rel (%p470) target = $region60
        $region59: #{tpu_custom_call.1} parent=31 // pred_region
          %s474 = ssub.s32 16, 16
          %475 = vsyncadd [#allocation9], %s474
          %478 = dma.smem_to_hbm [#allocation8], 16, %s3, [#allocation9]
        $region60: #{tpu_custom_call.1} parent=31 // pred_fallthru
          _
        // Predicated region
        $region61: #{tpu_custom_call.1} parent=31 // pred_check
          %p479 = pneg %p141
        $region62: #{tpu_custom_call.1} parent=31 // pred_check_branch
          %481 = sbr.rel (%p479) target = $region64
        $region63: #{tpu_custom_call.1} parent=31 // pred_region
          %s483 = ssub.s32 16, 16
          %484 = vsyncadd [#allocation11], %s483
          %487 = dma.smem_to_hbm [#allocation10], 16, %s4, [#allocation11]
        $region64: #{tpu_custom_call.1} parent=31 // pred_fallthru
          _
        // Predicated region
        $region65: #{tpu_custom_call.1} parent=31 // pred_check
          %p488 = pneg %p120
        $region66: #{tpu_custom_call.1} parent=31 // pred_check_branch
          %490 = sbr.rel (%p488) target = $region68
        $region67: #{tpu_custom_call.1} parent=31 // pred_region
          %491 = dma.done [#allocation9], 16
        $region68: #{tpu_custom_call.1} parent=31 // pred_fallthru
          _
        // Predicated region
        $region69: #{tpu_custom_call.1} parent=31 // pred_check
          %p492 = pneg %p141
        $region70: #{tpu_custom_call.1} parent=31 // pred_check_branch
          %494 = sbr.rel (%p492) target = $region72
        $region71: #{tpu_custom_call.1} parent=31 // pred_region
          %495 = dma.done [#allocation11], 16
        $region72: #{tpu_custom_call.1} parent=31 // pred_fallthru
          _
        %496 = sfence
      $region32: #{tpu_custom_call.1} parent=5 // pred_fallthru
        _
      %p497 = scmp.le.s32.totalorder 2, %s14
      // Predicated region
      $region73: #{tpu_custom_call.1} parent=5 // pred_check
        %p498 = pneg %p497
      $region74: #{tpu_custom_call.1} parent=5 // pred_check_branch
        %500 = sbr.rel (%p498) target = $region76
      $region75: #{tpu_custom_call.1} parent=5 // pred_region
        %s501 = ssub.s32 %s14, 2
      $region76: #{tpu_custom_call.1} parent=5 // pred_fallthru
        _
    $region6: #{tpu_custom_call.1} parent=1 // loop_footer
      %s18 = sadd.s32 1, %s14
    $region7: #{tpu_custom_call.1} parent=1 // loop_footer_branch
      %13 = sbr.rel target = $region3
    $region8: #{tpu_custom_call.1} parent=1 // loop_exit
      _
    %502 = vsyncpa [#allocation9], 1
    %s503 = scalar_lea.sflag [#allocation9], 1
    %504 = vsyncpa %s503, 1
    %505 = vsyncpa [#allocation11], 1

</llo_original>
